<compile_context>
chip_gen: v5e
topology: v5e:2x2
jax: 0.10.0
libtpu: 0.0.40
codegen_flags: <defaults>
</compile_context>

<pallas_src>
import jax
import jax.numpy as jnp
from jax.experimental import pallas as pl
from jax.experimental.pallas import tpu as pltpu

LN_EPS = 1e-5  # PyTorch nn.LayerNorm default


def _round_up(x, m):
    return (x + m - 1) // m * m


def _layernorm(h, gamma, beta):
    # Two independent reductions (E[h], E[h^2]) -> shorter dependent chain
    # than mean -> subtract -> square -> mean.
    n = h.shape[-1]
    inv_n = 1.0 / float(n)
    s1 = jnp.sum(h, axis=-1, keepdims=True)
    s2 = jnp.sum(h * h, axis=-1, keepdims=True)
    mu = s1 * inv_n
    var = s2 * inv_n - mu * mu
    return (h - mu) * jax.lax.rsqrt(var + LN_EPS) * gamma + beta


def actor_kernel(x_ref,
                 w1_ref, b1_ref, g1_ref, be1_ref,
                 w2_ref, b2_ref, g2_ref, be2_ref,
                 w3_ref, b3_ref,
                 out_ref):
    # fc1 -> LayerNorm -> ReLU   (bf16 matmul inputs, f32 accumulation)
    x = x_ref[...].astype(jnp.bfloat16)
    h = jnp.dot(x, w1_ref[...], preferred_element_type=jnp.float32) + b1_ref[...]
    h = _layernorm(h, g1_ref[...], be1_ref[...])
    h = jnp.maximum(h, 0.0)

    # fc2 -> LayerNorm -> ReLU
    h = jnp.dot(h.astype(jnp.bfloat16), w2_ref[...],
                preferred_element_type=jnp.float32) + b2_ref[...]
    h = _layernorm(h, g2_ref[...], be2_ref[...])
    h = jnp.maximum(h, 0.0)

    # fc3 (lane-padded to 128 outputs) -> tanh
    o = jnp.dot(h.astype(jnp.bfloat16), w3_ref[...],
                preferred_element_type=jnp.float32) + b3_ref[...]
    out_ref[...] = jnp.tanh(o).astype(out_ref.dtype)


def actor_forward(state, params, *, tb=512):
    """state: (B, D_in) f32. params: dict of f32 arrays (see init_params).

    tb: max batch-tile rows per grid step (multiple of 8; use a multiple of
    128/256 to fill MXU rows for large batches).
    """
    B, d_in = state.shape
    fc1 = params["w1"].shape[1]
    fc2 = params["w2"].shape[1]
    n_actions = params["w3"].shape[1]

    # Batch tiling: tile must be a multiple of 8 sublanes; pad B up to a
    # multiple of the tile.
    TB = min(_round_up(max(tb, 8), 8), _round_up(B, 8))
    B_pad = _round_up(B, TB)

    # Lane-dense state loads / MXU-aligned K: pad input features to 128.
    d_pad = _round_up(max(d_in, 128), 128)
    if B_pad != B or d_pad != d_in:
        state = jnp.pad(state, ((0, B_pad - B), (0, d_pad - d_in)))
    grid = (B_pad // TB,)

    # Lane-dense fc3 output: pad output columns to a multiple of 128.
    n_pad = _round_up(max(n_actions, 128), 128)
    w3 = jnp.pad(params["w3"], ((0, 0), (0, n_pad - n_actions)))
    b3 = jnp.pad(params["b3"], ((0, 0), (0, n_pad - n_actions)))

    # bf16 weights for the MXU; biases / LN params stay f32. w1 rows padded
    # with zeros to match the padded input features (result unchanged).
    w1 = jnp.pad(params["w1"], ((0, d_pad - d_in), (0, 0))).astype(jnp.bfloat16)
    w2 = params["w2"].astype(jnp.bfloat16)
    w3 = w3.astype(jnp.bfloat16)

    def resident(shape):
        # Weight / bias / LN params: same block every grid step -> stays
        # VMEM-resident, no re-DMA.
        return pl.BlockSpec(shape, lambda i: (0, 0))

    in_specs = [
        pl.BlockSpec((TB, d_pad), lambda i: (i, 0)),     # state tile
        resident((d_pad, fc1)), resident((1, fc1)),      # w1, b1
        resident((1, fc1)), resident((1, fc1)),          # g1, be1
        resident((fc1, fc2)), resident((1, fc2)),        # w2, b2
        resident((1, fc2)), resident((1, fc2)),          # g2, be2
        resident((fc2, n_pad)), resident((1, n_pad)),    # w3, b3
    ]
    out_spec = pl.BlockSpec((TB, n_pad), lambda i: (i, 0))

    flops = 2 * B_pad * (d_pad * fc1 + fc1 * fc2 + fc2 * n_pad)
    bytes_accessed = (
        B_pad * d_pad * 4                    # state (f32)
        + (w1.size + w2.size + w3.size) * 2  # bf16 weights
        + (fc1 * 4 + fc2 * 4) * 3 + n_pad * 4  # biases + LN params (f32)
        + B_pad * n_pad * 4                  # output (f32)
    )
    cost = pl.CostEstimate(
        flops=flops,
        transcendentals=B_pad * (n_pad + 2),   # tanh + 2x rsqrt per row
        bytes_accessed=bytes_accessed,
    )

    out = pl.pallas_call(
        actor_kernel,
        out_shape=jax.ShapeDtypeStruct((B_pad, n_pad), jnp.float32),
        grid=grid,
        in_specs=in_specs,
        out_specs=out_spec,
        compiler_params=pltpu.CompilerParams(
            dimension_semantics=("parallel",),     # shard batch tiles over TCs
            vmem_limit_bytes=32 * 1024 * 1024,
        ),
        cost_estimate=cost,
    )(state,
      w1, params["b1"], params["g1"], params["be1"],
      w2, params["b2"], params["g2"], params["be2"],
      w3, b3)

    return out[:B, :n_actions]


def init_params(key, input_dim, fc1_dims, fc2_dims, n_actions):
    """Deterministic init mirroring ActorNetwork.init_weights:
       uniform_(0, f) with f = 1/sqrt(weight.size(0)) = 1/sqrt(out_features)
       for fc1/fc2, and f = 0.003 for fc3. LayerNorm: gamma=1, beta=0."""
    k = jax.random.split(key, 6)
    f1 = 1.0 / jnp.sqrt(jnp.float32(fc1_dims))
    f2 = 1.0 / jnp.sqrt(jnp.float32(fc2_dims))
    f3 = 0.003

    def u(kk, shape, f):
        return jax.random.uniform(kk, shape, jnp.float32, minval=0.0, maxval=f)

    return {
        # weights stored as (in, out)  (transpose of PyTorch's (out, in))
        "w1": u(k[0], (input_dim, fc1_dims), f1),
        "b1": u(k[1], (1, fc1_dims), f1),
        "g1": jnp.ones((1, fc1_dims), jnp.float32),
        "be1": jnp.zeros((1, fc1_dims), jnp.float32),
        "w2": u(k[2], (fc1_dims, fc2_dims), f2),
        "b2": u(k[3], (1, fc2_dims), f2),
        "g2": jnp.ones((1, fc2_dims), jnp.float32),
        "be2": jnp.zeros((1, fc2_dims), jnp.float32),
        "w3": u(k[4], (fc2_dims, n_actions), f3),
        "b3": u(k[5], (1, n_actions), f3),
    }


def _ln_ref(h, gamma, beta):
    mu = jnp.mean(h, axis=-1, keepdims=True)
    var = jnp.mean((h - mu) * (h - mu), axis=-1, keepdims=True)
    return (h - mu) * jax.lax.rsqrt(var + LN_EPS) * gamma + beta


def reference_forward(state, p):
    # Same numerics as the kernel: bf16 matmul inputs, f32 accumulation,
    # f32 LayerNorm / ReLU / tanh.
    def mm(a, w):
        return jnp.dot(a.astype(jnp.bfloat16), w.astype(jnp.bfloat16),
                       preferred_element_type=jnp.float32)

    h = mm(state, p["w1"]) + p["b1"]
    h = jnp.maximum(_ln_ref(h, p["g1"], p["be1"]), 0.0)
    h = mm(h, p["w2"]) + p["b2"]
    h = jnp.maximum(_ln_ref(h, p["g2"], p["be2"]), 0.0)
    return jnp.tanh(mm(h, p["w3"]) + p["b3"])


if __name__ == "__main__":
    key = jax.random.PRNGKey(0)
    k_state, k_params = jax.random.split(key)

    B, D_IN, FC1, FC2, N_ACT = 8, 16, 256, 256, 2  # small, consistent with module
    state = jax.random.normal(k_state, (B, D_IN), jnp.float32)
    params = init_params(k_params, D_IN, FC1, FC2, N_ACT)

    out = actor_forward(state, params)
    out = jax.block_until_ready(out)

    ref = reference_forward(state, params)
    assert out.shape == (B, N_ACT)
    assert jnp.allclose(out, ref, atol=1e-3, rtol=1e-3)
    print("KERNEL_OK")
</pallas_src>

<mosaic_0001>
module attributes {stable_mosaic.version = 11 : i64} {
  func.func @actor_kernel(%arg0: i32, %arg1: memref<8x128xf32, #tpu.memory_space<vmem>>, %arg2: memref<128x256xbf16, #tpu.memory_space<vmem>>, %arg3: memref<1x256xf32, #tpu.memory_space<vmem>>, %arg4: memref<1x256xf32, #tpu.memory_space<vmem>>, %arg5: memref<1x256xf32, #tpu.memory_space<vmem>>, %arg6: memref<256x256xbf16, #tpu.memory_space<vmem>>, %arg7: memref<1x256xf32, #tpu.memory_space<vmem>>, %arg8: memref<1x256xf32, #tpu.memory_space<vmem>>, %arg9: memref<1x256xf32, #tpu.memory_space<vmem>>, %arg10: memref<256x128xbf16, #tpu.memory_space<vmem>>, %arg11: memref<1x128xf32, #tpu.memory_space<vmem>>, %arg12: memref<8x128xf32, #tpu.memory_space<vmem>>) attributes {dimension_semantics = [#tpu.dimension_semantics<parallel>], iteration_bounds = array<i64: 1>, scalar_prefetch = 0 : i64, scratch_operands = 0 : i64, tpu.core_type = #tpu.core_type<tc>, window_params = [{transform_indices = @transform_0, window_bounds = array<i64: 8, 128>}, {pipeline_mode = #tpu.pipeline_mode<synchronous>, transform_indices = @transform_1, window_bounds = array<i64: 128, 256>}, {pipeline_mode = #tpu.pipeline_mode<synchronous>, transform_indices = @transform_2, window_bounds = array<i64: 1, 256>}, {pipeline_mode = #tpu.pipeline_mode<synchronous>, transform_indices = @transform_3, window_bounds = array<i64: 1, 256>}, {pipeline_mode = #tpu.pipeline_mode<synchronous>, transform_indices = @transform_4, window_bounds = array<i64: 1, 256>}, {pipeline_mode = #tpu.pipeline_mode<synchronous>, transform_indices = @transform_5, window_bounds = array<i64: 256, 256>}, {pipeline_mode = #tpu.pipeline_mode<synchronous>, transform_indices = @transform_6, window_bounds = array<i64: 1, 256>}, {pipeline_mode = #tpu.pipeline_mode<synchronous>, transform_indices = @transform_7, window_bounds = array<i64: 1, 256>}, {pipeline_mode = #tpu.pipeline_mode<synchronous>, transform_indices = @transform_8, window_bounds = array<i64: 1, 256>}, {pipeline_mode = #tpu.pipeline_mode<synchronous>, transform_indices = @transform_9, window_bounds = array<i64: 256, 128>}, {pipeline_mode = #tpu.pipeline_mode<synchronous>, transform_indices = @transform_10, window_bounds = array<i64: 1, 128>}, {transform_indices = @transform_11, window_bounds = array<i64: 8, 128>}]} {
    %c0 = arith.constant 0 : index
    %c0_0 = arith.constant 0 : index
    %0 = vector.load %arg1[%c0, %c0_0] : memref<8x128xf32, #tpu.memory_space<vmem>>, vector<8x128xf32>
    %1 = arith.truncf %0 : vector<8x128xf32> to vector<8x128xbf16>
    %c0_1 = arith.constant 0 : index
    %c0_2 = arith.constant 0 : index
    %2 = vector.load %arg2[%c0_1, %c0_2] : memref<128x256xbf16, #tpu.memory_space<vmem>>, vector<128x256xbf16>
    %cst = arith.constant dense<0.000000e+00> : vector<8x256xf32>
    %3 = tpu.matmul %1, %2, %cst {dimension_numbers = #tpu.dot_dimension_numbers<[1], [0], [0], [1], [0, 0, 1, 1], [], []>} : vector<8x128xbf16>, vector<128x256xbf16>, vector<8x256xf32> -> vector<8x256xf32>
    %c0_3 = arith.constant 0 : index
    %c0_4 = arith.constant 0 : index
    %4 = vector.load %arg3[%c0_3, %c0_4] : memref<1x256xf32, #tpu.memory_space<vmem>>, vector<1x256xf32>
    %5 = vector.broadcast %4 : vector<1x256xf32> to vector<8x256xf32>
    %6 = arith.addf %3, %5 : vector<8x256xf32>
    %c0_5 = arith.constant 0 : index
    %c0_6 = arith.constant 0 : index
    %7 = vector.load %arg4[%c0_5, %c0_6] : memref<1x256xf32, #tpu.memory_space<vmem>>, vector<1x256xf32>
    %c0_7 = arith.constant 0 : index
    %c0_8 = arith.constant 0 : index
    %8 = vector.load %arg5[%c0_7, %c0_8] : memref<1x256xf32, #tpu.memory_space<vmem>>, vector<1x256xf32>
    %cst_9 = arith.constant dense<0.000000e+00> : vector<8xf32>
    %9 = vector.multi_reduction <add>, %6, %cst_9 [1] : vector<8x256xf32> to vector<8xf32>
    %10 = vector.shape_cast %9 : vector<8xf32> to vector<8x1xf32>
    %11 = arith.mulf %6, %6 : vector<8x256xf32>
    %cst_10 = arith.constant dense<0.000000e+00> : vector<8xf32>
    %12 = vector.multi_reduction <add>, %11, %cst_10 [1] : vector<8x256xf32> to vector<8xf32>
    %13 = vector.shape_cast %12 : vector<8xf32> to vector<8x1xf32>
    %cst_11 = arith.constant 3.906250e-03 : f32
    %14 = vector.broadcast %cst_11 : f32 to vector<8x1xf32>
    %15 = arith.mulf %10, %14 : vector<8x1xf32>
    %cst_12 = arith.constant 3.906250e-03 : f32
    %16 = vector.broadcast %cst_12 : f32 to vector<8x1xf32>
    %17 = arith.mulf %13, %16 : vector<8x1xf32>
    %18 = arith.mulf %15, %15 : vector<8x1xf32>
    %19 = arith.subf %17, %18 : vector<8x1xf32>
    %20 = vector.broadcast %15 : vector<8x1xf32> to vector<8x256xf32>
    %21 = arith.subf %6, %20 : vector<8x256xf32>
    %cst_13 = arith.constant 9.99999974E-6 : f32
    %22 = vector.broadcast %cst_13 : f32 to vector<8x1xf32>
    %23 = arith.addf %19, %22 : vector<8x1xf32>
    %24 = math.rsqrt %23 : vector<8x1xf32>
    %25 = vector.broadcast %24 : vector<8x1xf32> to vector<8x256xf32>
    %26 = arith.mulf %21, %25 : vector<8x256xf32>
    %27 = vector.broadcast %7 : vector<1x256xf32> to vector<8x256xf32>
    %28 = arith.mulf %26, %27 : vector<8x256xf32>
    %29 = vector.broadcast %8 : vector<1x256xf32> to vector<8x256xf32>
    %30 = arith.addf %28, %29 : vector<8x256xf32>
    %cst_14 = arith.constant 0.000000e+00 : f32
    %31 = vector.broadcast %cst_14 : f32 to vector<8x256xf32>
    %32 = arith.maximumf %30, %31 : vector<8x256xf32>
    %33 = arith.truncf %32 : vector<8x256xf32> to vector<8x256xbf16>
    %c0_15 = arith.constant 0 : index
    %c0_16 = arith.constant 0 : index
    %34 = vector.load %arg6[%c0_15, %c0_16] : memref<256x256xbf16, #tpu.memory_space<vmem>>, vector<256x256xbf16>
    %cst_17 = arith.constant dense<0.000000e+00> : vector<8x256xf32>
    %35 = tpu.matmul %33, %34, %cst_17 {dimension_numbers = #tpu.dot_dimension_numbers<[1], [0], [0], [1], [0, 0, 1, 1], [], []>} : vector<8x256xbf16>, vector<256x256xbf16>, vector<8x256xf32> -> vector<8x256xf32>
    %c0_18 = arith.constant 0 : index
    %c0_19 = arith.constant 0 : index
    %36 = vector.load %arg7[%c0_18, %c0_19] : memref<1x256xf32, #tpu.memory_space<vmem>>, vector<1x256xf32>
    %37 = vector.broadcast %36 : vector<1x256xf32> to vector<8x256xf32>
    %38 = arith.addf %35, %37 : vector<8x256xf32>
    %c0_20 = arith.constant 0 : index
    %c0_21 = arith.constant 0 : index
    %39 = vector.load %arg8[%c0_20, %c0_21] : memref<1x256xf32, #tpu.memory_space<vmem>>, vector<1x256xf32>
    %c0_22 = arith.constant 0 : index
    %c0_23 = arith.constant 0 : index
    %40 = vector.load %arg9[%c0_22, %c0_23] : memref<1x256xf32, #tpu.memory_space<vmem>>, vector<1x256xf32>
    %cst_24 = arith.constant dense<0.000000e+00> : vector<8xf32>
    %41 = vector.multi_reduction <add>, %38, %cst_24 [1] : vector<8x256xf32> to vector<8xf32>
    %42 = vector.shape_cast %41 : vector<8xf32> to vector<8x1xf32>
    %43 = arith.mulf %38, %38 : vector<8x256xf32>
    %cst_25 = arith.constant dense<0.000000e+00> : vector<8xf32>
    %44 = vector.multi_reduction <add>, %43, %cst_25 [1] : vector<8x256xf32> to vector<8xf32>
    %45 = vector.shape_cast %44 : vector<8xf32> to vector<8x1xf32>
    %cst_26 = arith.constant 3.906250e-03 : f32
    %46 = vector.broadcast %cst_26 : f32 to vector<8x1xf32>
    %47 = arith.mulf %42, %46 : vector<8x1xf32>
    %cst_27 = arith.constant 3.906250e-03 : f32
    %48 = vector.broadcast %cst_27 : f32 to vector<8x1xf32>
    %49 = arith.mulf %45, %48 : vector<8x1xf32>
    %50 = arith.mulf %47, %47 : vector<8x1xf32>
    %51 = arith.subf %49, %50 : vector<8x1xf32>
    %52 = vector.broadcast %47 : vector<8x1xf32> to vector<8x256xf32>
    %53 = arith.subf %38, %52 : vector<8x256xf32>
    %cst_28 = arith.constant 9.99999974E-6 : f32
    %54 = vector.broadcast %cst_28 : f32 to vector<8x1xf32>
    %55 = arith.addf %51, %54 : vector<8x1xf32>
    %56 = math.rsqrt %55 : vector<8x1xf32>
    %57 = vector.broadcast %56 : vector<8x1xf32> to vector<8x256xf32>
    %58 = arith.mulf %53, %57 : vector<8x256xf32>
    %59 = vector.broadcast %39 : vector<1x256xf32> to vector<8x256xf32>
    %60 = arith.mulf %58, %59 : vector<8x256xf32>
    %61 = vector.broadcast %40 : vector<1x256xf32> to vector<8x256xf32>
    %62 = arith.addf %60, %61 : vector<8x256xf32>
    %cst_29 = arith.constant 0.000000e+00 : f32
    %63 = vector.broadcast %cst_29 : f32 to vector<8x256xf32>
    %64 = arith.maximumf %62, %63 : vector<8x256xf32>
    %65 = arith.truncf %64 : vector<8x256xf32> to vector<8x256xbf16>
    %c0_30 = arith.constant 0 : index
    %c0_31 = arith.constant 0 : index
    %66 = vector.load %arg10[%c0_30, %c0_31] : memref<256x128xbf16, #tpu.memory_space<vmem>>, vector<256x128xbf16>
    %cst_32 = arith.constant dense<0.000000e+00> : vector<8x128xf32>
    %67 = tpu.matmul %65, %66, %cst_32 {dimension_numbers = #tpu.dot_dimension_numbers<[1], [0], [0], [1], [0, 0, 1, 1], [], []>} : vector<8x256xbf16>, vector<256x128xbf16>, vector<8x128xf32> -> vector<8x128xf32>
    %c0_33 = arith.constant 0 : index
    %c0_34 = arith.constant 0 : index
    %68 = vector.load %arg11[%c0_33, %c0_34] : memref<1x128xf32, #tpu.memory_space<vmem>>, vector<1x128xf32>
    %69 = vector.broadcast %68 : vector<1x128xf32> to vector<8x128xf32>
    %70 = arith.addf %67, %69 : vector<8x128xf32>
    %71 = math.tanh %70 : vector<8x128xf32>
    %c0_35 = arith.constant 0 : index
    %c0_36 = arith.constant 0 : index
    %72 = vector.load %arg12[%c0_35, %c0_36] : memref<8x128xf32, #tpu.memory_space<vmem>>, vector<8x128xf32>
    tpu.vector_store %arg12[%c0_35, %c0_36], %71 {strides = array<i32>} : memref<8x128xf32, #tpu.memory_space<vmem>>, vector<8x128xf32>,
    return
  }
  func.func @transform_0(%arg0: i32) -> (i32, i32) {
    %c0_i32 = arith.constant 0 : i32
    %c0_i32_0 = arith.constant 0 : i32
    return %arg0, %c0_i32 : i32, i32
  }
  func.func @transform_1(%arg0: i32) -> (i32, i32) {
    %c0_i32 = arith.constant 0 : i32
    %c0_i32_0 = arith.constant 0 : i32
    %c0_i32_1 = arith.constant 0 : i32
    return %c0_i32, %c0_i32_0 : i32, i32
  }
  func.func @transform_2(%arg0: i32) -> (i32, i32) {
    %c0_i32 = arith.constant 0 : i32
    %c0_i32_0 = arith.constant 0 : i32
    %c0_i32_1 = arith.constant 0 : i32
    return %c0_i32, %c0_i32_0 : i32, i32
  }
  func.func @transform_3(%arg0: i32) -> (i32, i32) {
    %c0_i32 = arith.constant 0 : i32
    %c0_i32_0 = arith.constant 0 : i32
    %c0_i32_1 = arith.constant 0 : i32
    return %c0_i32, %c0_i32_0 : i32, i32
  }
  func.func @transform_4(%arg0: i32) -> (i32, i32) {
    %c0_i32 = arith.constant 0 : i32
    %c0_i32_0 = arith.constant 0 : i32
    %c0_i32_1 = arith.constant 0 : i32
    return %c0_i32, %c0_i32_0 : i32, i32
  }
  func.func @transform_5(%arg0: i32) -> (i32, i32) {
    %c0_i32 = arith.constant 0 : i32
    %c0_i32_0 = arith.constant 0 : i32
    %c0_i32_1 = arith.constant 0 : i32
    return %c0_i32, %c0_i32_0 : i32, i32
  }
  func.func @transform_6(%arg0: i32) -> (i32, i32) {
    %c0_i32 = arith.constant 0 : i32
    %c0_i32_0 = arith.constant 0 : i32
    %c0_i32_1 = arith.constant 0 : i32
    return %c0_i32, %c0_i32_0 : i32, i32
  }
  func.func @transform_7(%arg0: i32) -> (i32, i32) {
    %c0_i32 = arith.constant 0 : i32
    %c0_i32_0 = arith.constant 0 : i32
    %c0_i32_1 = arith.constant 0 : i32
    return %c0_i32, %c0_i32_0 : i32, i32
  }
  func.func @transform_8(%arg0: i32) -> (i32, i32) {
    %c0_i32 = arith.constant 0 : i32
    %c0_i32_0 = arith.constant 0 : i32
    %c0_i32_1 = arith.constant 0 : i32
    return %c0_i32, %c0_i32_0 : i32, i32
  }
  func.func @transform_9(%arg0: i32) -> (i32, i32) {
    %c0_i32 = arith.constant 0 : i32
    %c0_i32_0 = arith.constant 0 : i32
    %c0_i32_1 = arith.constant 0 : i32
    return %c0_i32, %c0_i32_0 : i32, i32
  }
  func.func @transform_10(%arg0: i32) -> (i32, i32) {
    %c0_i32 = arith.constant 0 : i32
    %c0_i32_0 = arith.constant 0 : i32
    %c0_i32_1 = arith.constant 0 : i32
    return %c0_i32, %c0_i32_0 : i32, i32
  }
  func.func @transform_11(%arg0: i32) -> (i32, i32) {
    %c0_i32 = arith.constant 0 : i32
    %c0_i32_0 = arith.constant 0 : i32
    return %arg0, %c0_i32 : i32, i32
  }
}

</mosaic_0001>

<llo_original>
// kernel: tpu_custom_call.1
$region0: #{tpu_custom_call.1}
  #allocation0 [shape = 'u32[]', space=smem, size = 0x4, offset = 0x4, fixed_abs, tag = 'smem constant byte address 0x4 - core index']
  #allocation1 [shape = 'u32[72,128]{1,0:T(1,128)}', space=vmem, size = 0x9000, scoped, tag = 'internal scratch']
  %s0 = inlined_call_operand.hbm [shape: f32[8,128], index: 0, kind: input, shape index: {}]
  %s1 = inlined_call_operand.hbm [shape: bf16[128,256], index: 1, kind: input, shape index: {}]
  %s2 = inlined_call_operand.hbm [shape: f32[1,256], index: 2, kind: input, shape index: {}]
  %s3 = inlined_call_operand.vmem [shape: f32[1,256], index: 3, kind: input, shape index: {}]
  %s4 = inlined_call_operand.hbm [shape: f32[1,256], index: 4, kind: input, shape index: {}]
  %s5 = inlined_call_operand.hbm [shape: bf16[256,256], index: 5, kind: input, shape index: {}]
  %s6 = inlined_call_operand.vmem [shape: f32[1,256], index: 6, kind: input, shape index: {}]
  %s7 = inlined_call_operand.vmem [shape: f32[1,256], index: 7, kind: input, shape index: {}]
  %s8 = inlined_call_operand.hbm [shape: f32[1,256], index: 8, kind: input, shape index: {}]
  %s9 = inlined_call_operand.hbm [shape: bf16[256,128], index: 9, kind: input, shape index: {}]
  %s10 = inlined_call_operand.vmem [shape: f32[1,128], index: 10, kind: input, shape index: {}]
  %s11 = inlined_call_operand.hbm [shape: f32[8,128], index: 11, kind: output, shape index: {}]
  %s12 = sld [smem:[#allocation0]]
  $region82: #{tpu_custom_call.1} parent=0
    _
  %s14 = ssub.s32 1, %s12
  %s15 = scalar_select 0, %s14, %s12
  $region1: #{tpu_custom_call.1} parent=0
    #allocation2 [shape = 'u8[4096]{0}', space=vmem, size = 0x1000, scoped, tag = 'input window, operand 0, single buffered']
    #allocation3 [shape = 's32[1]{0}', space=sflag, size = 0x4, scoped, tag = 'scoped memory for tpu_custom_call.1']
    #allocation4 [shape = 's32[1]{0}', space=sflag, size = 0x4, scoped, tag = 'scoped memory for tpu_custom_call.1']
    #allocation5 [shape = 'u8[65536]{0}', space=vmem, size = 0x10000, scoped, tag = 'input window, operand 1, single buffered']
    #allocation6 [shape = 's32[1]{0}', space=sflag, size = 0x4, scoped, tag = 'scoped memory for tpu_custom_call.1']
    #allocation7 [shape = 'u8[1024]{0}', space=vmem, size = 0x400, scoped, tag = 'input window, operand 2, single buffered']
    #allocation8 [shape = 'u8[1024]{0}', space=vmem, size = 0x400, scoped, tag = 'input window, operand 4, single buffered']
    #allocation9 [shape = 's32[1]{0}', space=sflag, size = 0x4, scoped, tag = 'scoped memory for tpu_custom_call.1']
    #allocation10 [shape = 'u8[131072]{0}', space=vmem, size = 0x20000, scoped, tag = 'input window, operand 5, single buffered']
    #allocation11 [shape = 'u8[1024]{0}', space=vmem, size = 0x400, scoped, tag = 'input window, operand 8, single buffered']
    #allocation12 [shape = 's32[1]{0}', space=sflag, size = 0x4, scoped, tag = 'scoped memory for tpu_custom_call.1']
    #allocation13 [shape = 'u8[65536]{0}', space=vmem, size = 0x10000, scoped, tag = 'input window, operand 9, single buffered']
    #allocation14 [shape = 'u8[4096]{0}', space=vmem, size = 0x1000, scoped, tag = 'output window, operand 0, single buffered']
    %16 = vsyncpa [#allocation3], 0
    %17 = vsyncpa [#allocation6], 0
    %18 = vsyncpa [#allocation9], 0
    %19 = vsyncpa [#allocation12], 0
    %20 = vsyncpa [#allocation4], 0
    // Predicated region
    $region2: #{tpu_custom_call.1} parent=1 // pred_check
      _
    $region3: #{tpu_custom_call.1} parent=1 // pred_check_branch
      %22 = sbr.rel (0) target = $region5
    $region4: #{tpu_custom_call.1} parent=1 // pred_region
      %24 = vsyncadd [#allocation3], 0
      %s26 = sshll.u32 %s0, 4
      %s27 = int_to_ptr.hbm [resolvable:$true] %s26
      %s28 = sshll.u32 [#allocation2], 4
      %s29 = int_to_ptr.vmem [resolvable:$true] %s28
      %31 = dma.hbm_to_vmem [thread:$0]  %s27, 128, %s29, [#allocation3]
    $region5: #{tpu_custom_call.1} parent=1 // pred_fallthru
      _
    // Predicated region
    $region6: #{tpu_custom_call.1} parent=1 // pred_check
      _
    $region7: #{tpu_custom_call.1} parent=1 // pred_check_branch
      %33 = sbr.rel (0) target = $region9
    $region8: #{tpu_custom_call.1} parent=1 // pred_region
      %35 = vsyncadd [#allocation6], 0
      %s36 = sshll.u32 %s1, 4
      %s37 = int_to_ptr.hbm [resolvable:$true] %s36
      %s38 = sshll.u32 [#allocation5], 4
      %s39 = int_to_ptr.vmem [resolvable:$true] %s38
      %44 = dma.hbm_to_vmem [thread:$0]  %s37, 2048, %s39, [#allocation6], 128, 128, 8
    $region9: #{tpu_custom_call.1} parent=1 // pred_fallthru
      _
    // Predicated region
    $region10: #{tpu_custom_call.1} parent=1 // pred_check
      _
    $region11: #{tpu_custom_call.1} parent=1 // pred_check_branch
      %46 = sbr.rel (0) target = $region13
    $region12: #{tpu_custom_call.1} parent=1 // pred_region
      %48 = vsyncadd [#allocation6], 0
      %s50 = sshll.u32 %s2, 4
      %s51 = int_to_ptr.hbm [resolvable:$true] %s50
      %s52 = sshll.u32 [#allocation7], 4
      %s53 = int_to_ptr.vmem [resolvable:$true] %s52
      %55 = dma.hbm_to_vmem [thread:$0]  %s51, 32, %s53, [#allocation6]
    $region13: #{tpu_custom_call.1} parent=1 // pred_fallthru
      _
    // Predicated region
    $region14: #{tpu_custom_call.1} parent=1 // pred_check
      _
    $region15: #{tpu_custom_call.1} parent=1 // pred_check_branch
      %57 = sbr.rel (0) target = $region17
    $region16: #{tpu_custom_call.1} parent=1 // pred_region
      _
    $region17: #{tpu_custom_call.1} parent=1 // pred_fallthru
      _
    // Predicated region
    $region18: #{tpu_custom_call.1} parent=1 // pred_check
      _
    $region19: #{tpu_custom_call.1} parent=1 // pred_check_branch
      %59 = sbr.rel (0) target = $region21
    $region20: #{tpu_custom_call.1} parent=1 // pred_region
      %61 = vsyncadd [#allocation9], 0
      %s63 = sshll.u32 %s4, 4
      %s64 = int_to_ptr.hbm [resolvable:$true] %s63
      %s65 = sshll.u32 [#allocation8], 4
      %s66 = int_to_ptr.vmem [resolvable:$true] %s65
      %68 = dma.hbm_to_vmem [thread:$0]  %s64, 32, %s66, [#allocation9]
    $region21: #{tpu_custom_call.1} parent=1 // pred_fallthru
      _
    // Predicated region
    $region22: #{tpu_custom_call.1} parent=1 // pred_check
      _
    $region23: #{tpu_custom_call.1} parent=1 // pred_check_branch
      %70 = sbr.rel (0) target = $region25
    $region24: #{tpu_custom_call.1} parent=1 // pred_region
      %72 = vsyncadd [#allocation9], 0
      %s73 = sshll.u32 %s5, 4
      %s74 = int_to_ptr.hbm [resolvable:$true] %s73
      %s75 = sshll.u32 [#allocation10], 4
      %s76 = int_to_ptr.vmem [resolvable:$true] %s75
      %81 = dma.hbm_to_vmem [thread:$0]  %s74, 4096, %s76, [#allocation9], 128, 128, 8
    $region25: #{tpu_custom_call.1} parent=1 // pred_fallthru
      _
    // Predicated region
    $region26: #{tpu_custom_call.1} parent=1 // pred_check
      _
    $region27: #{tpu_custom_call.1} parent=1 // pred_check_branch
      %83 = sbr.rel (0) target = $region29
    $region28: #{tpu_custom_call.1} parent=1 // pred_region
      _
    $region29: #{tpu_custom_call.1} parent=1 // pred_fallthru
      _
    // Predicated region
    $region30: #{tpu_custom_call.1} parent=1 // pred_check
      _
    $region31: #{tpu_custom_call.1} parent=1 // pred_check_branch
      %85 = sbr.rel (0) target = $region33
    $region32: #{tpu_custom_call.1} parent=1 // pred_region
      _
    $region33: #{tpu_custom_call.1} parent=1 // pred_fallthru
      _
    // Predicated region
    $region34: #{tpu_custom_call.1} parent=1 // pred_check
      _
    $region35: #{tpu_custom_call.1} parent=1 // pred_check_branch
      %87 = sbr.rel (0) target = $region37
    $region36: #{tpu_custom_call.1} parent=1 // pred_region
      %89 = vsyncadd [#allocation12], 0
      %s91 = sshll.u32 %s8, 4
      %s92 = int_to_ptr.hbm [resolvable:$true] %s91
      %s93 = sshll.u32 [#allocation11], 4
      %s94 = int_to_ptr.vmem [resolvable:$true] %s93
      %96 = dma.hbm_to_vmem [thread:$0]  %s92, 32, %s94, [#allocation12]
    $region37: #{tpu_custom_call.1} parent=1 // pred_fallthru
      _
    // Predicated region
    $region38: #{tpu_custom_call.1} parent=1 // pred_check
      _
    $region39: #{tpu_custom_call.1} parent=1 // pred_check_branch
      %98 = sbr.rel (0) target = $region41
    $region40: #{tpu_custom_call.1} parent=1 // pred_region
      %100 = vsyncadd [#allocation12], 0
      %s101 = sshll.u32 %s9, 4
      %s102 = int_to_ptr.hbm [resolvable:$true] %s101
      %s103 = sshll.u32 [#allocation13], 4
      %s104 = int_to_ptr.vmem [resolvable:$true] %s103
      %109 = dma.hbm_to_vmem [thread:$0]  %s102, 2048, %s104, [#allocation12], 64, 64, 4
    $region41: #{tpu_custom_call.1} parent=1 // pred_fallthru
      _
    // Predicated region
    $region42: #{tpu_custom_call.1} parent=1 // pred_check
      _
    $region43: #{tpu_custom_call.1} parent=1 // pred_check_branch
      %111 = sbr.rel (0) target = $region45
    $region44: #{tpu_custom_call.1} parent=1 // pred_region
      _
    $region45: #{tpu_custom_call.1} parent=1 // pred_fallthru
      _
    // Predicated region
    $region46: #{tpu_custom_call.1} parent=1 // pred_check
      _
    $region47: #{tpu_custom_call.1} parent=1 // pred_check_branch
      %113 = sbr.rel (0) target = $region49
    $region48: #{tpu_custom_call.1} parent=1 // pred_region
      %115 = dma.done [#allocation3], 128
    $region49: #{tpu_custom_call.1} parent=1 // pred_fallthru
      _
    // Predicated region
    $region50: #{tpu_custom_call.1} parent=1 // pred_check
      _
    $region51: #{tpu_custom_call.1} parent=1 // pred_check_branch
      %117 = sbr.rel (0) target = $region53
    $region52: #{tpu_custom_call.1} parent=1 // pred_region
      %119 = dma.done [#allocation6], 2048
    $region53: #{tpu_custom_call.1} parent=1 // pred_fallthru
      _
    // Predicated region
    $region54: #{tpu_custom_call.1} parent=1 // pred_check
      _
    $region55: #{tpu_custom_call.1} parent=1 // pred_check_branch
      %121 = sbr.rel (0) target = $region57
    $region56: #{tpu_custom_call.1} parent=1 // pred_region
      %123 = dma.done [#allocation6], 32
    $region57: #{tpu_custom_call.1} parent=1 // pred_fallthru
      _
    // Predicated region
    $region58: #{tpu_custom_call.1} parent=1 // pred_check
      _
    $region59: #{tpu_custom_call.1} parent=1 // pred_check_branch
      %125 = sbr.rel (0) target = $region61
    $region60: #{tpu_custom_call.1} parent=1 // pred_region
      %127 = dma.done [#allocation9], 32
    $region61: #{tpu_custom_call.1} parent=1 // pred_fallthru
      _
    // Predicated region
    $region62: #{tpu_custom_call.1} parent=1 // pred_check
      _
    $region63: #{tpu_custom_call.1} parent=1 // pred_check_branch
      %129 = sbr.rel (0) target = $region65
    $region64: #{tpu_custom_call.1} parent=1 // pred_region
      %131 = dma.done [#allocation9], 4096
    $region65: #{tpu_custom_call.1} parent=1 // pred_fallthru
      _
    // Predicated region
    $region66: #{tpu_custom_call.1} parent=1 // pred_check
      _
    $region67: #{tpu_custom_call.1} parent=1 // pred_check_branch
      %133 = sbr.rel (0) target = $region69
    $region68: #{tpu_custom_call.1} parent=1 // pred_region
      %135 = dma.done [#allocation12], 32
    $region69: #{tpu_custom_call.1} parent=1 // pred_fallthru
      _
    // Predicated region
    $region70: #{tpu_custom_call.1} parent=1 // pred_check
      _
    $region71: #{tpu_custom_call.1} parent=1 // pred_check_branch
      %137 = sbr.rel (0) target = $region73
    $region72: #{tpu_custom_call.1} parent=1 // pred_region
      %139 = dma.done [#allocation12], 2048
    $region73: #{tpu_custom_call.1} parent=1 // pred_fallthru
      _
    %v140 = vld [vmem:[#allocation2] sm:$0xff]
    %v141 = vpack.c.bf16 %v140, %v140
    %v142 = vld [vmem:[#allocation5] sm:$0xff]
    %v143 = vld [vmem:[#allocation5 + $0x8] sm:$0xff]
    %v144 = vld [vmem:[#allocation5 + $0x10] sm:$0xff]
    %v145 = vld [vmem:[#allocation5 + $0x18] sm:$0xff]
    %v146 = vld [vmem:[#allocation5 + $0x20] sm:$0xff]
    %v147 = vld [vmem:[#allocation5 + $0x28] sm:$0xff]
    %v148 = vld [vmem:[#allocation5 + $0x30] sm:$0xff]
    %v149 = vld [vmem:[#allocation5 + $0x38] sm:$0xff]
    %v150 = vld [vmem:[#allocation5 + $0x40] sm:$0xff]
    %v151 = vld [vmem:[#allocation5 + $0x48] sm:$0xff]
    %v152 = vld [vmem:[#allocation5 + $0x50] sm:$0xff]
    %v153 = vld [vmem:[#allocation5 + $0x58] sm:$0xff]
    %v154 = vld [vmem:[#allocation5 + $0x60] sm:$0xff]
    %v155 = vld [vmem:[#allocation5 + $0x68] sm:$0xff]
    %v156 = vld [vmem:[#allocation5 + $0x70] sm:$0xff]
    %v157 = vld [vmem:[#allocation5 + $0x78] sm:$0xff]
    %v158 = vld [vmem:[#allocation7] sm:$0x3]
    %v160 = vperm.slane %v158, 0
    %v161 = vperm.slane %v158, 1
    %v180 = vunpack.c.l.b16 %v142
    %v181 = vunpack.c.h.b16 %v142
    %v182 = vunpack.c.l.b16 %v143
    %v183 = vunpack.c.h.b16 %v143
    %v184 = vunpack.c.l.b16 %v144
    %v185 = vunpack.c.h.b16 %v144
    %v186 = vunpack.c.l.b16 %v145
    %v187 = vunpack.c.h.b16 %v145
    %v188 = vunpack.c.l.b16 %v146
    %v189 = vunpack.c.h.b16 %v146
    %v190 = vunpack.c.l.b16 %v147
    %v191 = vunpack.c.h.b16 %v147
    %v192 = vunpack.c.l.b16 %v148
    %v193 = vunpack.c.h.b16 %v148
    %v194 = vunpack.c.l.b16 %v149
    %v195 = vunpack.c.h.b16 %v149
    %v196 = vunpack.c.l.b16 %v150
    %v197 = vunpack.c.h.b16 %v150
    %v198 = vunpack.c.l.b16 %v151
    %v199 = vunpack.c.h.b16 %v151
    %v200 = vunpack.c.l.b16 %v152
    %v201 = vunpack.c.h.b16 %v152
    %v202 = vunpack.c.l.b16 %v153
    %v203 = vunpack.c.h.b16 %v153
    %v204 = vunpack.c.l.b16 %v154
    %v205 = vunpack.c.h.b16 %v154
    %v206 = vunpack.c.l.b16 %v155
    %v207 = vunpack.c.h.b16 %v155
    %v208 = vunpack.c.l.b16 %v156
    %v209 = vunpack.c.h.b16 %v156
    %v210 = vunpack.c.l.b16 %v157
    %v211 = vunpack.c.h.b16 %v157
    %v212 = vpack.c.b16 %v182, %v180
    %v213 = vpack.c.b16 %v183, %v181
    %v214 = vpack.c.b16 %v186, %v184
    %v215 = vpack.c.b16 %v187, %v185
    %v216 = vpack.c.b16 %v190, %v188
    %v217 = vpack.c.b16 %v191, %v189
    %v218 = vpack.c.b16 %v194, %v192
    %v219 = vpack.c.b16 %v195, %v193
    %v220 = vpack.c.b16 %v198, %v196
    %v221 = vpack.c.b16 %v199, %v197
    %v222 = vpack.c.b16 %v202, %v200
    %v223 = vpack.c.b16 %v203, %v201
    %v224 = vpack.c.b16 %v206, %v204
    %v225 = vpack.c.b16 %v207, %v205
    %v226 = vpack.c.b16 %v210, %v208
    %v227 = vpack.c.b16 %v211, %v209
    %244 = vmatpush.bf16.msra.mxu0 %v226
    %245 = vmatpush.bf16.msra.mxu0 %v224
    %246 = vmatpush.bf16.msra.mxu0 %v222
    %247 = vmatpush.bf16.msra.mxu0 %v220
    %248 = vmatpush.bf16.msra.mxu0 %v218
    %249 = vmatpush.bf16.msra.mxu0 %v216
    %250 = vmatpush.bf16.msra.mxu0 %v214
    %251 = vmatpush.bf16.msra.mxu0 %v212
    %252 = vmatmul.bf16.gmra.mxu0 %v141
    %v253 = vpop.f32.mrf.mxu0
    %v254 = vadd.f32 %v160, %v253
    %v255 = vpop.f32.mrf.mxu0
    %256 = vdwg.mxu0
    %257 = vmatpush.bf16.msra.mxu0 %v227
    %258 = vmatpush.bf16.msra.mxu0 %v225
    %259 = vmatpush.bf16.msra.mxu0 %v223
    %260 = vmatpush.bf16.msra.mxu0 %v221
    %261 = vmatpush.bf16.msra.mxu0 %v219
    %262 = vmatpush.bf16.msra.mxu0 %v217
    %263 = vmatpush.bf16.msra.mxu0 %v215
    %264 = vmatpush.bf16.msra.mxu0 %v213
    %265 = vmatmul.bf16.gmra.mxu0 %v141
    %v266 = vpop.f32.mrf.mxu0
    %v267 = vadd.f32 %v161, %v266
    %v268 = vpop.f32.mrf.mxu0
    %269 = vdwg.mxu0
    %v270 = vld [vmem:[%s3] sm:$0x3]
    %v271 = vld [vmem:[#allocation8] sm:$0x3]
    %v272 = vadd.f32 %v254, %v267
    %273 = vadd.xlane.f32.xlu0 %v272
    %v274 = vpop.xlane.xlu0 %273
    %v275 = vmul.f32 %v254, %v254
    %v276 = vmul.f32 %v267, %v267
    %v277 = vadd.f32 %v275, %v276
    %278 = vadd.xlane.f32.xlu0 %v277
    %v279 = vpop.xlane.xlu0 %278
    %v280 = vmul.f32 %v274, 0.00390625
    %v281 = vmul.f32 %v279, 0.00390625
    %v282 = vmul.f32 %v280, %v280
    %v283 = vsub.f32 %v281, %v282
    %v284 = vsub.f32 %v254, %v280
    %v285 = vsub.f32 %v267, %v280
    %v286 = vadd.f32 %v283, 1e-05
    %v287 = vrsqrt.pop %v286
    %v288 = vmul.f32 %v287, %v286
    %v289 = vmul.f32 %v288, %v287
    %v290 = vmul.f32 0.5, %v289
    %v291 = vsub.f32 1.5, %v290
    %v292 = vmul.f32 %v287, %v291
    %vm293 = vweird.f32 %v286
    %vm294 = vweird.f32 %v287
    %vm295 = vmor %vm293, %vm294
    %v296 = vsel %vm295, %v287, %v292
    %v297 = vmul.f32 %v284, %v296
    %v298 = vmul.f32 %v285, %v296
    %v300 = vperm.slane %v270, 0
    %v301 = vperm.slane %v270, 1
    %v304 = vmul.f32 %v297, %v300
    %v305 = vmul.f32 %v298, %v301
    %v307 = vperm.slane %v271, 0
    %v308 = vperm.slane %v271, 1
    %v311 = vadd.f32 %v304, %v307
    %v312 = vadd.f32 %v305, %v308
    %v313 = vmax.f32 %v311, 0.0
    %v314 = vmax.f32 %v312, 0.0
    %v315 = vpack.c.bf16 %v313, %v313
    %v316 = vpack.c.bf16 %v314, %v314
    %v317 = vld [vmem:[#allocation10] sm:$0xff]
    %v318 = vld [vmem:[#allocation10 + $0x8] sm:$0xff]
    %v319 = vld [vmem:[#allocation10 + $0x10] sm:$0xff]
    %v320 = vld [vmem:[#allocation10 + $0x18] sm:$0xff]
    %v321 = vld [vmem:[#allocation10 + $0x20] sm:$0xff]
    %v322 = vld [vmem:[#allocation10 + $0x28] sm:$0xff]
    %v323 = vld [vmem:[#allocation10 + $0x30] sm:$0xff]
    %v324 = vld [vmem:[#allocation10 + $0x38] sm:$0xff]
    %v325 = vld [vmem:[#allocation10 + $0x40] sm:$0xff]
    %v326 = vld [vmem:[#allocation10 + $0x48] sm:$0xff]
    %v327 = vld [vmem:[#allocation10 + $0x50] sm:$0xff]
    %v328 = vld [vmem:[#allocation10 + $0x58] sm:$0xff]
    %v329 = vld [vmem:[#allocation10 + $0x60] sm:$0xff]
    %v330 = vld [vmem:[#allocation10 + $0x68] sm:$0xff]
    %v331 = vld [vmem:[#allocation10 + $0x70] sm:$0xff]
    %v332 = vld [vmem:[#allocation10 + $0x78] sm:$0xff]
    %v333 = vld [vmem:[#allocation10 + $0x80] sm:$0xff]
    %v334 = vld [vmem:[#allocation10 + $0x88] sm:$0xff]
    %v335 = vld [vmem:[#allocation10 + $0x90] sm:$0xff]
    %v336 = vld [vmem:[#allocation10 + $0x98] sm:$0xff]
    %v337 = vld [vmem:[#allocation10 + $0xa0] sm:$0xff]
    %v338 = vld [vmem:[#allocation10 + $0xa8] sm:$0xff]
    %v339 = vld [vmem:[#allocation10 + $0xb0] sm:$0xff]
    %v340 = vld [vmem:[#allocation10 + $0xb8] sm:$0xff]
    %v341 = vld [vmem:[#allocation10 + $0xc0] sm:$0xff]
    %v342 = vld [vmem:[#allocation10 + $0xc8] sm:$0xff]
    %v343 = vld [vmem:[#allocation10 + $0xd0] sm:$0xff]
    %v344 = vld [vmem:[#allocation10 + $0xd8] sm:$0xff]
    %v345 = vld [vmem:[#allocation10 + $0xe0] sm:$0xff]
    %v346 = vld [vmem:[#allocation10 + $0xe8] sm:$0xff]
    %v347 = vld [vmem:[#allocation10 + $0xf0] sm:$0xff]
    %v348 = vld [vmem:[#allocation10 + $0xf8] sm:$0xff]
    %v349 = vld [vmem:[%s6] sm:$0x3]
    %v351 = vperm.slane %v349, 0
    %v352 = vperm.slane %v349, 1
    %v387 = vunpack.c.l.b16 %v317
    %v388 = vunpack.c.h.b16 %v317
    %v389 = vunpack.c.l.b16 %v318
    %v390 = vunpack.c.h.b16 %v318
    %v391 = vunpack.c.l.b16 %v319
    %v392 = vunpack.c.h.b16 %v319
    %v393 = vunpack.c.l.b16 %v320
    %v394 = vunpack.c.h.b16 %v320
    %v395 = vunpack.c.l.b16 %v321
    %v396 = vunpack.c.h.b16 %v321
    %v397 = vunpack.c.l.b16 %v322
    %v398 = vunpack.c.h.b16 %v322
    %v399 = vunpack.c.l.b16 %v323
    %v400 = vunpack.c.h.b16 %v323
    %v401 = vunpack.c.l.b16 %v324
    %v402 = vunpack.c.h.b16 %v324
    %v403 = vunpack.c.l.b16 %v325
    %v404 = vunpack.c.h.b16 %v325
    %v405 = vunpack.c.l.b16 %v326
    %v406 = vunpack.c.h.b16 %v326
    %v407 = vunpack.c.l.b16 %v327
    %v408 = vunpack.c.h.b16 %v327
    %v409 = vunpack.c.l.b16 %v328
    %v410 = vunpack.c.h.b16 %v328
    %v411 = vunpack.c.l.b16 %v329
    %v412 = vunpack.c.h.b16 %v329
    %v413 = vunpack.c.l.b16 %v330
    %v414 = vunpack.c.h.b16 %v330
    %v415 = vunpack.c.l.b16 %v331
    %v416 = vunpack.c.h.b16 %v331
    %v417 = vunpack.c.l.b16 %v332
    %v418 = vunpack.c.h.b16 %v332
    %v419 = vunpack.c.l.b16 %v333
    %v420 = vunpack.c.h.b16 %v333
    %v421 = vunpack.c.l.b16 %v334
    %v422 = vunpack.c.h.b16 %v334
    %v423 = vunpack.c.l.b16 %v335
    %v424 = vunpack.c.h.b16 %v335
    %v425 = vunpack.c.l.b16 %v336
    %v426 = vunpack.c.h.b16 %v336
    %v427 = vunpack.c.l.b16 %v337
    %v428 = vunpack.c.h.b16 %v337
    %v429 = vunpack.c.l.b16 %v338
    %v430 = vunpack.c.h.b16 %v338
    %v431 = vunpack.c.l.b16 %v339
    %v432 = vunpack.c.h.b16 %v339
    %v433 = vunpack.c.l.b16 %v340
    %v434 = vunpack.c.h.b16 %v340
    %v435 = vunpack.c.l.b16 %v341
    %v436 = vunpack.c.h.b16 %v341
    %v437 = vunpack.c.l.b16 %v342
    %v438 = vunpack.c.h.b16 %v342
    %v439 = vunpack.c.l.b16 %v343
    %v440 = vunpack.c.h.b16 %v343
    %v441 = vunpack.c.l.b16 %v344
    %v442 = vunpack.c.h.b16 %v344
    %v443 = vunpack.c.l.b16 %v345
    %v444 = vunpack.c.h.b16 %v345
    %v445 = vunpack.c.l.b16 %v346
    %v446 = vunpack.c.h.b16 %v346
    %v447 = vunpack.c.l.b16 %v347
    %v448 = vunpack.c.h.b16 %v347
    %v449 = vunpack.c.l.b16 %v348
    %v450 = vunpack.c.h.b16 %v348
    %v451 = vpack.c.b16 %v389, %v387
    %v452 = vpack.c.b16 %v390, %v388
    %v453 = vpack.c.b16 %v393, %v391
    %v454 = vpack.c.b16 %v394, %v392
    %v455 = vpack.c.b16 %v397, %v395
    %v456 = vpack.c.b16 %v398, %v396
    %v457 = vpack.c.b16 %v401, %v399
    %v458 = vpack.c.b16 %v402, %v400
    %v459 = vpack.c.b16 %v405, %v403
    %v460 = vpack.c.b16 %v406, %v404
    %v461 = vpack.c.b16 %v409, %v407
    %v462 = vpack.c.b16 %v410, %v408
    %v463 = vpack.c.b16 %v413, %v411
    %v464 = vpack.c.b16 %v414, %v412
    %v465 = vpack.c.b16 %v417, %v415
    %v466 = vpack.c.b16 %v418, %v416
    %v467 = vpack.c.b16 %v421, %v419
    %v468 = vpack.c.b16 %v422, %v420
    %v469 = vpack.c.b16 %v425, %v423
    %v470 = vpack.c.b16 %v426, %v424
    %v471 = vpack.c.b16 %v429, %v427
    %v472 = vpack.c.b16 %v430, %v428
    %v473 = vpack.c.b16 %v433, %v431
    %v474 = vpack.c.b16 %v434, %v432
    %v475 = vpack.c.b16 %v437, %v435
    %v476 = vpack.c.b16 %v438, %v436
    %v477 = vpack.c.b16 %v441, %v439
    %v478 = vpack.c.b16 %v442, %v440
    %v479 = vpack.c.b16 %v445, %v443
    %v480 = vpack.c.b16 %v446, %v444
    %v481 = vpack.c.b16 %v449, %v447
    %v482 = vpack.c.b16 %v450, %v448
    %515 = vmatpush.bf16.msra.mxu0 %v465
    %516 = vmatpush.bf16.msra.mxu0 %v463
    %517 = vmatpush.bf16.msra.mxu0 %v461
    %518 = vmatpush.bf16.msra.mxu0 %v459
    %519 = vmatpush.bf16.msra.mxu0 %v457
    %520 = vmatpush.bf16.msra.mxu0 %v455
    %521 = vmatpush.bf16.msra.mxu0 %v453
    %522 = vmatpush.bf16.msra.mxu0 %v451
    %523 = vmatmul.bf16.gmra.mxu0 %v315
    %v524 = vpop.f32.mrf.mxu0
    %v525 = vadd.f32 %v351, %v524
    %v526 = vpop.f32.mrf.mxu0
    %527 = vdwg.mxu0
    %528 = vmatpush.bf16.msra.mxu0 %v481
    %529 = vmatpush.bf16.msra.mxu0 %v479
    %530 = vmatpush.bf16.msra.mxu0 %v477
    %531 = vmatpush.bf16.msra.mxu0 %v475
    %532 = vmatpush.bf16.msra.mxu0 %v473
    %533 = vmatpush.bf16.msra.mxu0 %v471
    %534 = vmatpush.bf16.msra.mxu0 %v469
    %535 = vmatpush.bf16.msra.mxu0 %v467
    %536 = vmatmul.bf16.gmra.mxu0 %v316
    %v537 = vpop.f32.mrf.mxu0
    %v538 = vadd.f32 %v525, %v537
    %v539 = vpop.f32.mrf.mxu0
    %540 = vdwg.mxu0
    %541 = vmatpush.bf16.msra.mxu0 %v466
    %542 = vmatpush.bf16.msra.mxu0 %v464
    %543 = vmatpush.bf16.msra.mxu0 %v462
    %544 = vmatpush.bf16.msra.mxu0 %v460
    %545 = vmatpush.bf16.msra.mxu0 %v458
    %546 = vmatpush.bf16.msra.mxu0 %v456
    %547 = vmatpush.bf16.msra.mxu0 %v454
    %548 = vmatpush.bf16.msra.mxu0 %v452
    %549 = vmatmul.bf16.gmra.mxu0 %v315
    %v550 = vpop.f32.mrf.mxu0
    %v551 = vadd.f32 %v352, %v550
    %v552 = vpop.f32.mrf.mxu0
    %553 = vdwg.mxu0
    %554 = vmatpush.bf16.msra.mxu0 %v482
    %555 = vmatpush.bf16.msra.mxu0 %v480
    %556 = vmatpush.bf16.msra.mxu0 %v478
    %557 = vmatpush.bf16.msra.mxu0 %v476
    %558 = vmatpush.bf16.msra.mxu0 %v474
    %559 = vmatpush.bf16.msra.mxu0 %v472
    %560 = vmatpush.bf16.msra.mxu0 %v470
    %561 = vmatpush.bf16.msra.mxu0 %v468
    %562 = vmatmul.bf16.gmra.mxu0 %v316
    %v563 = vpop.f32.mrf.mxu0
    %v564 = vadd.f32 %v551, %v563
    %v565 = vpop.f32.mrf.mxu0
    %566 = vdwg.mxu0
    %v567 = vld [vmem:[%s7] sm:$0x3]
    %v568 = vld [vmem:[#allocation11] sm:$0x3]
    %v569 = vadd.f32 %v538, %v564
    %570 = vadd.xlane.f32.xlu0 %v569
    %v571 = vpop.xlane.xlu0 %570
    %v572 = vmul.f32 %v538, %v538
    %v573 = vmul.f32 %v564, %v564
    %v574 = vadd.f32 %v572, %v573
    %575 = vadd.xlane.f32.xlu0 %v574
    %v576 = vpop.xlane.xlu0 %575
    %v577 = vmul.f32 %v571, 0.00390625
    %v578 = vmul.f32 %v576, 0.00390625
    %v579 = vmul.f32 %v577, %v577
    %v580 = vsub.f32 %v578, %v579
    %v581 = vsub.f32 %v538, %v577
    %v582 = vsub.f32 %v564, %v577
    %v583 = vadd.f32 %v580, 1e-05
    %v584 = vrsqrt.pop %v583
    %v585 = vmul.f32 %v584, %v583
    %v586 = vmul.f32 %v585, %v584
    %v587 = vmul.f32 0.5, %v586
    %v588 = vsub.f32 1.5, %v587
    %v589 = vmul.f32 %v584, %v588
    %vm590 = vweird.f32 %v583
    %vm591 = vweird.f32 %v584
    %vm592 = vmor %vm590, %vm591
    %v593 = vsel %vm592, %v584, %v589
    %v594 = vmul.f32 %v581, %v593
    %v595 = vmul.f32 %v582, %v593
    %v597 = vperm.slane %v567, 0
    %v598 = vperm.slane %v567, 1
    %v601 = vmul.f32 %v594, %v597
    %v602 = vmul.f32 %v595, %v598
    %v604 = vperm.slane %v568, 0
    %v605 = vperm.slane %v568, 1
    %v608 = vadd.f32 %v601, %v604
    %v609 = vadd.f32 %v602, %v605
    %v610 = vmax.f32 %v608, 0.0
    %v611 = vmax.f32 %v609, 0.0
    %v612 = vpack.c.bf16 %v610, %v610
    %v613 = vpack.c.bf16 %v611, %v611
    %v614 = vld [vmem:[#allocation13] sm:$0xf]
    %v615 = vld [vmem:[#allocation13 + $0x4] sm:$0xf]
    %v616 = vld [vmem:[#allocation13 + $0x8] sm:$0xf]
    %v617 = vld [vmem:[#allocation13 + $0xc] sm:$0xf]
    %v618 = vld [vmem:[#allocation13 + $0x10] sm:$0xf]
    %v619 = vld [vmem:[#allocation13 + $0x14] sm:$0xf]
    %v620 = vld [vmem:[#allocation13 + $0x18] sm:$0xf]
    %v621 = vld [vmem:[#allocation13 + $0x1c] sm:$0xf]
    %v622 = vld [vmem:[#allocation13 + $0x20] sm:$0xf]
    %v623 = vld [vmem:[#allocation13 + $0x24] sm:$0xf]
    %v624 = vld [vmem:[#allocation13 + $0x28] sm:$0xf]
    %v625 = vld [vmem:[#allocation13 + $0x2c] sm:$0xf]
    %v626 = vld [vmem:[#allocation13 + $0x30] sm:$0xf]
    %v627 = vld [vmem:[#allocation13 + $0x34] sm:$0xf]
    %v628 = vld [vmem:[#allocation13 + $0x38] sm:$0xf]
    %v629 = vld [vmem:[#allocation13 + $0x3c] sm:$0xf]
    %v630 = vld [vmem:[#allocation13 + $0x40] sm:$0xf]
    %v631 = vld [vmem:[#allocation13 + $0x44] sm:$0xf]
    %v632 = vld [vmem:[#allocation13 + $0x48] sm:$0xf]
    %v633 = vld [vmem:[#allocation13 + $0x4c] sm:$0xf]
    %v634 = vld [vmem:[#allocation13 + $0x50] sm:$0xf]
    %v635 = vld [vmem:[#allocation13 + $0x54] sm:$0xf]
    %v636 = vld [vmem:[#allocation13 + $0x58] sm:$0xf]
    %v637 = vld [vmem:[#allocation13 + $0x5c] sm:$0xf]
    %v638 = vld [vmem:[#allocation13 + $0x60] sm:$0xf]
    %v639 = vld [vmem:[#allocation13 + $0x64] sm:$0xf]
    %v640 = vld [vmem:[#allocation13 + $0x68] sm:$0xf]
    %v641 = vld [vmem:[#allocation13 + $0x6c] sm:$0xf]
    %v642 = vld [vmem:[#allocation13 + $0x70] sm:$0xf]
    %v643 = vld [vmem:[#allocation13 + $0x74] sm:$0xf]
    %v644 = vld [vmem:[#allocation13 + $0x78] sm:$0xf]
    %v645 = vld [vmem:[#allocation13 + $0x7c] sm:$0xf]
    %v646 = vld [vmem:[%s10] sm:$0x1]
    %v648 = vperm.slane %v646, 0
    %v682 = vunpack.c.l.b16 %v614
    %v683 = vunpack.c.l.b16 %v615
    %v684 = vunpack.c.l.b16 %v616
    %v685 = vunpack.c.l.b16 %v617
    %v686 = vunpack.c.l.b16 %v618
    %v687 = vunpack.c.l.b16 %v619
    %v688 = vunpack.c.l.b16 %v620
    %v689 = vunpack.c.l.b16 %v621
    %v690 = vunpack.c.l.b16 %v622
    %v691 = vunpack.c.l.b16 %v623
    %v692 = vunpack.c.l.b16 %v624
    %v693 = vunpack.c.l.b16 %v625
    %v694 = vunpack.c.l.b16 %v626
    %v695 = vunpack.c.l.b16 %v627
    %v696 = vunpack.c.l.b16 %v628
    %v697 = vunpack.c.l.b16 %v629
    %v698 = vunpack.c.l.b16 %v630
    %v699 = vunpack.c.l.b16 %v631
    %v700 = vunpack.c.l.b16 %v632
    %v701 = vunpack.c.l.b16 %v633
    %v702 = vunpack.c.l.b16 %v634
    %v703 = vunpack.c.l.b16 %v635
    %v704 = vunpack.c.l.b16 %v636
    %v705 = vunpack.c.l.b16 %v637
    %v706 = vunpack.c.l.b16 %v638
    %v707 = vunpack.c.l.b16 %v639
    %v708 = vunpack.c.l.b16 %v640
    %v709 = vunpack.c.l.b16 %v641
    %v710 = vunpack.c.l.b16 %v642
    %v711 = vunpack.c.l.b16 %v643
    %v712 = vunpack.c.l.b16 %v644
    %v713 = vunpack.c.l.b16 %v645
    %v714 = vpack.c.b16 %v683, %v682
    %v715 = vpack.c.b16 %v685, %v684
    %v716 = vpack.c.b16 %v687, %v686
    %v717 = vpack.c.b16 %v689, %v688
    %v718 = vpack.c.b16 %v691, %v690
    %v719 = vpack.c.b16 %v693, %v692
    %v720 = vpack.c.b16 %v695, %v694
    %v721 = vpack.c.b16 %v697, %v696
    %v722 = vpack.c.b16 %v699, %v698
    %v723 = vpack.c.b16 %v701, %v700
    %v724 = vpack.c.b16 %v703, %v702
    %v725 = vpack.c.b16 %v705, %v704
    %v726 = vpack.c.b16 %v707, %v706
    %v727 = vpack.c.b16 %v709, %v708
    %v728 = vpack.c.b16 %v711, %v710
    %v729 = vpack.c.b16 %v713, %v712
    %746 = vmatpush.bf16.msra.mxu0 %v721
    %747 = vmatpush.bf16.msra.mxu0 %v720
    %748 = vmatpush.bf16.msra.mxu0 %v719
    %749 = vmatpush.bf16.msra.mxu0 %v718
    %750 = vmatpush.bf16.msra.mxu0 %v717
    %751 = vmatpush.bf16.msra.mxu0 %v716
    %752 = vmatpush.bf16.msra.mxu0 %v715
    %753 = vmatpush.bf16.msra.mxu0 %v714
    %754 = vmatmul.bf16.gmra.mxu0 %v612
    %v755 = vpop.f32.mrf.mxu0
    %v756 = vadd.f32 %v648, %v755
    %v757 = vpop.f32.mrf.mxu0
    %758 = vdwg.mxu0
    %759 = vmatpush.bf16.msra.mxu0 %v729
    %760 = vmatpush.bf16.msra.mxu0 %v728
    %761 = vmatpush.bf16.msra.mxu0 %v727
    %762 = vmatpush.bf16.msra.mxu0 %v726
    %763 = vmatpush.bf16.msra.mxu0 %v725
    %764 = vmatpush.bf16.msra.mxu0 %v724
    %765 = vmatpush.bf16.msra.mxu0 %v723
    %766 = vmatpush.bf16.msra.mxu0 %v722
    %767 = vmatmul.bf16.gmra.mxu0 %v613
    %v768 = vpop.f32.mrf.mxu0
    %v769 = vadd.f32 %v756, %v768
    %v770 = vpop.f32.mrf.mxu0
    %771 = vdwg.mxu0
    %v772 = vtanh.pop %v769
    %773 = vst [vmem:[#allocation14] sm:$0xff] %v772
    // Predicated region
    $region74: #{tpu_custom_call.1} parent=1 // pred_check
      _
    $region75: #{tpu_custom_call.1} parent=1 // pred_check_branch
      %775 = sbr.rel (0) target = $region77
    $region76: #{tpu_custom_call.1} parent=1 // pred_region
      %777 = vsyncadd [#allocation4], 0
      %s779 = sshll.u32 [#allocation14], 4
      %s780 = int_to_ptr.vmem [resolvable:$true] %s779
      %s781 = sshll.u32 %s11, 4
      %s782 = int_to_ptr.hbm [resolvable:$true] %s781
      %784 = dma.vmem_to_hbm [thread:$0]  %s780, 128, %s782, [#allocation4]
    $region77: #{tpu_custom_call.1} parent=1 // pred_fallthru
      _
    // Predicated region
    $region78: #{tpu_custom_call.1} parent=1 // pred_check
      _
    $region79: #{tpu_custom_call.1} parent=1 // pred_check_branch
      %786 = sbr.rel (0) target = $region81
    $region80: #{tpu_custom_call.1} parent=1 // pred_region
      %788 = dma.done [#allocation4], 128
    $region81: #{tpu_custom_call.1} parent=1 // pred_fallthru
      _
    %789 = vsyncpa [#allocation3], 1
    %790 = vsyncpa [#allocation6], 1
    %791 = vsyncpa [#allocation9], 1
    %792 = vsyncpa [#allocation12], 1
    %793 = vsyncpa [#allocation4], 1

</llo_original>
